<compile_context>
chip_gen: v6e
topology: v6e:2x2x1
jax: 0.10.0
libtpu: 0.0.40
codegen_flags: <defaults>
</compile_context>

<pallas_src>
import jax
import jax.numpy as jnp
from jax.experimental import pallas as pl
from jax.experimental.pallas import tpu as pltpu


# ----------------------------------------------------------------------------
# PE table construction (matches the PyTorch __init__ exactly).
# ----------------------------------------------------------------------------
def make_positional_table(max_length: int, dim_size: int) -> jnp.ndarray:
    i = jnp.arange(max_length, dtype=jnp.float32)[:, None]        # (L_max, 1)
    j = jnp.arange(dim_size, dtype=jnp.float32)[None, :]          # (1, D)
    j_even = jnp.floor(j / 2.0) * 2.0                             # j if even else j-1
    denom = jnp.power(jnp.float32(10000.0), j_even / jnp.float32(dim_size))
    angle = i / denom
    is_even = (jnp.arange(dim_size) % 2 == 0)[None, :]
    return jnp.where(is_even, jnp.sin(angle), jnp.cos(angle)).astype(jnp.float32)


# ----------------------------------------------------------------------------
# Kernel: one streaming elementwise add of a feature block with its PE block.
#   Path 1 blocks: (1, TL, TD) + (TL, TD)
#   Path 2 blocks: (TR, TC)    + (P, TC), P in {1, TR}
# Broadcasting covers both layouts with the same kernel.
# ----------------------------------------------------------------------------
def _pe_add_kernel(x_ref, pe_ref, o_ref):
    o_ref[...] = x_ref[...] + pe_ref[...]


def _budgets():
    """(per-block byte target, scoped-VMEM limit) tuned per TPU generation."""
    vmem = 128 * 1024 * 1024
    try:
        vmem = int(getattr(pltpu.get_tpu_info(), "vmem_capacity_bytes", vmem))
    except Exception:
        pass
    if vmem >= 128 * 1024 * 1024:                 # v5e / v6e (128 MiB VMEM)
        return 4 * 1024 * 1024, 64 * 1024 * 1024
    return 2 * 1024 * 1024, 32 * 1024 * 1024       # v7x (64 MiB physical VMEM)


def _divisors(n: int):
    out, i = [], 1
    while i * i <= n:
        if n % i == 0:
            out.append(i)
            if i != n // i:
                out.append(n // i)
        i += 1
    return sorted(out)


def positional_encoding_forward(features, pe_table, *, block_bytes=None):
    """features: (B, L, D); pe_table: (max_length, D) with L <= max_length."""
    B, L, D = features.shape
    max_len, table_d = pe_table.shape
    if table_d != D:
        raise ValueError(f"PE dim {table_d} != feature dim {D}")
    if L > max_len:
        raise ValueError(f"sequence length {L} exceeds max_length {max_len}")

    pe = pe_table[:L, :].astype(features.dtype)            # (L, D) glue slice
    itemsize = features.dtype.itemsize
    sub = max(8, 32 // itemsize)                           # dtype-aware sublane quantum
    default_bb, vmem_limit = _budgets()
    bb = int(block_bytes) if block_bytes is not None else default_bb

    def _cparams(n_axes):
        return pltpu.CompilerParams(
            dimension_semantics=("parallel",) * n_axes,
            vmem_limit_bytes=vmem_limit)

    # ------------------------------------------------------------------
    # Path 1: lane-aligned feature dim (D % 128 == 0).  Block (1, TL, TD)
    # with cdiv tiling; ragged last tiles are masked by Pallas.
    # ------------------------------------------------------------------
    if D % 128 == 0:
        lane_cap = max(128, (bb // (sub * itemsize)) // 128 * 128)
        TD = min(D, lane_cap)
        rows_budget = bb // (TD * itemsize)
        if rows_budget >= L or L <= sub:
            TL = L                                         # full dim: always legal
        else:
            TL = max(sub, (rows_budget // sub) * sub)      # multiple of sub, ragged tail ok
        nl, nd = pl.cdiv(L, TL), pl.cdiv(D, TD)

        # Batch innermost -> PE tile never re-DMA'd; leading axis has >=2
        # steps whenever possible (v7x dual-TensorCore sharding).
        if nl * nd == 1 and B > 1:
            grid = (B, 1, 1)
            x_map = lambda b, l, d: (b, l, d)
            pe_map = lambda b, l, d: (l, d)
        elif nd > nl:
            grid = (nd, nl, B)
            x_map = lambda d, l, b: (b, l, d)
            pe_map = lambda d, l, b: (l, d)
        else:
            grid = (nl, nd, B)
            x_map = lambda l, d, b: (b, l, d)
            pe_map = lambda l, d, b: (l, d)

        return pl.pallas_call(
            _pe_add_kernel,
            out_shape=jax.ShapeDtypeStruct((B, L, D), features.dtype),
            grid_spec=pltpu.PrefetchScalarGridSpec(
                num_scalar_prefetch=0,
                grid=grid,
                in_specs=[pl.BlockSpec((1, TL, TD), x_map),
                          pl.BlockSpec((TL, TD), pe_map)],
                out_specs=pl.BlockSpec((1, TL, TD), x_map)),
            compiler_params=_cparams(3),
        )(features, pe)

    # ------------------------------------------------------------------
    # Path 2: D not a multiple of 128.  Flatten the (L, D) tail per batch so
    # the lane axis is wide; columns tiled in 128-lane multiples (ragged tail
    # masked) under a VMEM budget.  For tiny batches, optionally fold a
    # divisor Lg of L into the row axis to fill sublanes.
    # ------------------------------------------------------------------
    C = L * D
    row_cap = max(sub, (bb // (128 * itemsize)) // sub * sub)

    Lg = 1
    if B < sub and L > 1:
        # score: lane-dense cols (+2) beats full-sublane rows (+1); tiebreak on cols.
        best = ((2 if C % 128 == 0 else 0), C, 1)
        for cand in _divisors(L):
            if cand < sub or cand % sub != 0 or cand > row_cap:
                continue
            cols_c = (L // cand) * D
            sc = ((2 if cols_c % 128 == 0 else 0) + 1, cols_c, cand)
            if sc > best:
                best = sc
        Lg = best[2]

    rows, cols = B * Lg, (L // Lg) * D
    x2 = features.reshape(rows, cols)                      # contiguous reshape (no copy)
    pe2 = pe.reshape(Lg, cols)

    if Lg > 1:
        TR = Lg                                            # one batch-fold per block (exact)
    elif rows < sub:
        TR = rows                                          # full row dim: legal
    else:
        TR = min((rows // sub) * sub, row_cap)             # multiple of sub; ragged tail masked

    col_budget = max(128, bb // (TR * itemsize))
    TC = cols if cols <= col_budget else (col_budget // 128) * 128
    nr, nc = pl.cdiv(rows, TR), pl.cdiv(cols, TC)

    if nc >= 2 or nr == 1:
        grid = (nc, nr)                                    # rows innermost -> PE tile reused
        x_map = lambda c, r: (r, c)
        pe_map = lambda c, r: (0, c)
    else:
        grid = (nr, nc)                                    # nc == 1: PE block constant anyway
        x_map = lambda r, c: (r, c)
        pe_map = lambda r, c: (0, c)

    out2 = pl.pallas_call(
        _pe_add_kernel,
        out_shape=jax.ShapeDtypeStruct((rows, cols), features.dtype),
        grid_spec=pltpu.PrefetchScalarGridSpec(
            num_scalar_prefetch=0,
            grid=grid,
            in_specs=[pl.BlockSpec((TR, TC), x_map),
                      pl.BlockSpec((Lg, TC), pe_map)],
            out_specs=pl.BlockSpec((TR, TC), x_map)),
        compiler_params=_cparams(2),
    )(x2, pe2)
    return out2.reshape(B, L, D)


if __name__ == "__main__":
    key = jax.random.PRNGKey(0)

    # Test 1: module-scale shapes (batch=2, seq=8, hidden=32) -> Path 2.
    B, L, D = 2, 8, 32
    MAX_LEN = 16
    feats = jax.random.normal(key, (B, L, D), dtype=jnp.float32)
    table = make_positional_table(MAX_LEN, D)
    out = jax.block_until_ready(positional_encoding_forward(feats, table))
    ref = feats + table[None, :L, :]
    assert out.shape == (B, L, D)
    assert jnp.allclose(out, ref, atol=1e-6, rtol=1e-6)

    # Test 2: lane-aligned hidden dim (D % 128 == 0) -> Path 1.
    B2, L2, D2 = 2, 8, 128
    feats2 = jax.random.normal(jax.random.fold_in(key, 1), (B2, L2, D2), jnp.float32)
    table2 = make_positional_table(MAX_LEN, D2)
    out2 = jax.block_until_ready(positional_encoding_forward(feats2, table2))
    assert jnp.allclose(out2, feats2 + table2[None, :L2, :], atol=1e-6, rtol=1e-6)

    # Test 3: force multi-block cdiv tiling with a ragged last row tile (Path 1).
    B3, L3, D3 = 2, 24, 128
    feats3 = jax.random.normal(jax.random.fold_in(key, 2), (B3, L3, D3), jnp.float32)
    table3 = make_positional_table(32, D3)
    out3 = jax.block_until_ready(
        positional_encoding_forward(feats3, table3, block_bytes=16 * 128 * 4))
    assert jnp.allclose(out3, feats3 + table3[None, :L3, :], atol=1e-6, rtol=1e-6)

    # Test 4: odd trailing dim with a ragged last column tile (Path 2 guard).
    B4, L4, D4 = 2, 10, 30
    feats4 = jax.random.normal(jax.random.fold_in(key, 3), (B4, L4, D4), jnp.float32)
    table4 = make_positional_table(16, D4)
    out4 = jax.block_until_ready(
        positional_encoding_forward(feats4, table4, block_bytes=2048))
    assert jnp.allclose(out4, feats4 + table4[None, :L4, :], atol=1e-6, rtol=1e-6)

    print("KERNEL_OK")
</pallas_src>

<mosaic_0001>
module attributes {stable_mosaic.version = 11 : i64} {
  func.func @_pe_add_kernel(%arg0: i32, %arg1: i32, %arg2: memref<2x256xf32, #tpu.memory_space<vmem>>, %arg3: memref<1x256xf32, #tpu.memory_space<vmem>>, %arg4: memref<2x256xf32, #tpu.memory_space<vmem>>) attributes {dimension_semantics = [#tpu.dimension_semantics<parallel>, #tpu.dimension_semantics<parallel>], iteration_bounds = array<i64: 1, 1>, scalar_prefetch = 0 : i64, scratch_operands = 0 : i64, tpu.core_type = #tpu.core_type<tc>, window_params = [{transform_indices = @transform_0, window_bounds = array<i64: 2, 256>}, {transform_indices = @transform_1, window_bounds = array<i64: 1, 256>}, {transform_indices = @transform_2, window_bounds = array<i64: 2, 256>}]} {
    %c0 = arith.constant 0 : index
    %c0_0 = arith.constant 0 : index
    %0 = vector.load %arg2[%c0, %c0_0] : memref<2x256xf32, #tpu.memory_space<vmem>>, vector<2x256xf32>
    %c0_1 = arith.constant 0 : index
    %c0_2 = arith.constant 0 : index
    %1 = vector.load %arg3[%c0_1, %c0_2] : memref<1x256xf32, #tpu.memory_space<vmem>>, vector<1x256xf32>
    %2 = vector.broadcast %1 : vector<1x256xf32> to vector<2x256xf32>
    %3 = arith.addf %0, %2 : vector<2x256xf32>
    %c0_3 = arith.constant 0 : index
    %c0_4 = arith.constant 0 : index
    %4 = vector.load %arg4[%c0_3, %c0_4] : memref<2x256xf32, #tpu.memory_space<vmem>>, vector<2x256xf32>
    tpu.vector_store %arg4[%c0_3, %c0_4], %3 {strides = array<i32>} : memref<2x256xf32, #tpu.memory_space<vmem>>, vector<2x256xf32>,
    return
  }
  func.func @transform_0(%arg0: i32, %arg1: i32) -> (i32, i32) {
    %c0_i32 = arith.constant 0 : i32
    return %arg1, %arg0 : i32, i32
  }
  func.func @transform_1(%arg0: i32, %arg1: i32) -> (i32, i32) {
    %c0_i32 = arith.constant 0 : i32
    %c0_i32_0 = arith.constant 0 : i32
    return %c0_i32, %arg0 : i32, i32
  }
  func.func @transform_2(%arg0: i32, %arg1: i32) -> (i32, i32) {
    %c0_i32 = arith.constant 0 : i32
    return %arg1, %arg0 : i32, i32
  }
}

</mosaic_0001>

<llo_original>
// kernel: tpu_custom_call.1
$region0: #{tpu_custom_call.1}
  #allocation0 [shape = 'u32[]', space=smem, size = 0x4, offset = 0x4, fixed_abs, tag = 'smem constant byte address 0x4 - core index']
  #allocation1 [shape = 'u32[144,128]{1,0:T(1,128)}', space=vmem, size = 0x12000, scoped, tag = 'internal scratch']
  %s0 = inlined_call_operand.hbm [shape: f32[2,256], index: 0, kind: input, shape index: {}]
  %s1 = inlined_call_operand.hbm [shape: f32[1,256], index: 1, kind: input, shape index: {}]
  %s2 = inlined_call_operand.hbm [shape: f32[2,256], index: 2, kind: output, shape index: {}]
  %s3 = sld [smem:[#allocation0]]
  $region26: #{tpu_custom_call.1} parent=0
    _
  %s5 = ssub.s32 1, %s3
  %s6 = scalar_select 0, %s5, %s3
  $region1: #{tpu_custom_call.1} parent=0
    #allocation2 [shape = 'u8[2048]{0}', space=vmem, size = 0x800, scoped, tag = 'input window, operand 0, single buffered']
    #allocation3 [shape = 's32[1]{0}', space=sflag, size = 0x4, scoped, tag = 'scoped memory for tpu_custom_call.1']
    #allocation4 [shape = 's32[1]{0}', space=sflag, size = 0x4, scoped, tag = 'scoped memory for tpu_custom_call.1']
    #allocation5 [shape = 'u8[1024]{0}', space=vmem, size = 0x400, scoped, tag = 'input window, operand 1, single buffered']
    #allocation6 [shape = 's32[1]{0}', space=sflag, size = 0x4, scoped, tag = 'scoped memory for tpu_custom_call.1']
    #allocation7 [shape = 'u8[2048]{0}', space=vmem, size = 0x800, scoped, tag = 'output window, operand 0, single buffered']
    %7 = vsyncpa [#allocation3], 0
    %8 = vsyncpa [#allocation6], 0
    %9 = vsyncpa [#allocation4], 0
    // Predicated region
    $region2: #{tpu_custom_call.1} parent=1 // pred_check
      _
    $region3: #{tpu_custom_call.1} parent=1 // pred_check_branch
      %11 = sbr.rel (0) target = $region5
    $region4: #{tpu_custom_call.1} parent=1 // pred_region
      %s13 = ssub.s32 64, 64
      %14 = vsyncadd [#allocation3], %s13
      %s16 = sshll.u32 [#allocation2], 4
      %s17 = int_to_ptr.vmem [resolvable:$true] %s16
      %19 = dma.hbm_to_vmem [thread:$0]  %s0, 64, %s17, [#allocation3]
    $region5: #{tpu_custom_call.1} parent=1 // pred_fallthru
      _
    // Predicated region
    $region6: #{tpu_custom_call.1} parent=1 // pred_check
      _
    $region7: #{tpu_custom_call.1} parent=1 // pred_check_branch
      %21 = sbr.rel (0) target = $region9
    $region8: #{tpu_custom_call.1} parent=1 // pred_region
      %s23 = ssub.s32 32, 32
      %24 = vsyncadd [#allocation6], %s23
      %s26 = sshll.u32 [#allocation5], 4
      %s27 = int_to_ptr.vmem [resolvable:$true] %s26
      %29 = dma.hbm_to_vmem [thread:$0]  %s1, 32, %s27, [#allocation6]
    $region9: #{tpu_custom_call.1} parent=1 // pred_fallthru
      _
    // Predicated region
    $region10: #{tpu_custom_call.1} parent=1 // pred_check
      _
    $region11: #{tpu_custom_call.1} parent=1 // pred_check_branch
      %31 = sbr.rel (0) target = $region13
    $region12: #{tpu_custom_call.1} parent=1 // pred_region
      %32 = dma.done [#allocation3], 64
    $region13: #{tpu_custom_call.1} parent=1 // pred_fallthru
      _
    // Predicated region
    $region14: #{tpu_custom_call.1} parent=1 // pred_check
      _
    $region15: #{tpu_custom_call.1} parent=1 // pred_check_branch
      %34 = sbr.rel (0) target = $region17
    $region16: #{tpu_custom_call.1} parent=1 // pred_region
      %35 = dma.done [#allocation6], 32
    $region17: #{tpu_custom_call.1} parent=1 // pred_fallthru
      _
    %v36 = vld [vmem:[#allocation2] sm:$0xf]
    %v37 = vld [vmem:[#allocation5] sm:$0x3]
    %v39 = vlaneseq
    %v40 = vshrl.u32 %v39, 7
    %v41 = vsub.s32 0, %v40
    %v42 = vrot.slane %v37, %v41
    %v43 = vlaneseq
    %v44 = vshrl.u32 %v43, 7
    %v45 = vsub.s32 1, %v44
    %v46 = vrot.slane %v37, %v45
    %v47 = vcombine.low %v42, %v46
    %v49 = vunpack.c.l.s4 1983009808
    %v50 = vunpack.c.0.s8 %v49
    %v51 = vlaneseq
    %v52 = vshrl.u32 %v51, 7
    %v53 = vsub.s32 %v50, %v52
    %v54 = vrot.slane %v47, %v53
    %v56 = vadd.f32 %v36, %v54
    %57 = vst [vmem:[#allocation7] sm:$0xf] %v56
    // Predicated region
    $region18: #{tpu_custom_call.1} parent=1 // pred_check
      _
    $region19: #{tpu_custom_call.1} parent=1 // pred_check_branch
      %59 = sbr.rel (0) target = $region21
    $region20: #{tpu_custom_call.1} parent=1 // pred_region
      %s61 = ssub.s32 64, 64
      %62 = vsyncadd [#allocation4], %s61
      %s64 = sshll.u32 [#allocation7], 4
      %s65 = int_to_ptr.vmem [resolvable:$true] %s64
      %67 = dma.vmem_to_hbm [thread:$0]  %s65, 64, %s2, [#allocation4]
    $region21: #{tpu_custom_call.1} parent=1 // pred_fallthru
      _
    // Predicated region
    $region22: #{tpu_custom_call.1} parent=1 // pred_check
      _
    $region23: #{tpu_custom_call.1} parent=1 // pred_check_branch
      %69 = sbr.rel (0) target = $region25
    $region24: #{tpu_custom_call.1} parent=1 // pred_region
      %70 = dma.done [#allocation4], 64
    $region25: #{tpu_custom_call.1} parent=1 // pred_fallthru
      _
    %71 = vsyncpa [#allocation3], 1
    %72 = vsyncpa [#allocation6], 1
    %73 = vsyncpa [#allocation4], 1

</llo_original>
